<compile_context>
chip_gen: v5e
topology: v5e:2x2
jax: 0.10.0
libtpu: 0.0.40
codegen_flags: <defaults>
</compile_context>

<pallas_src>
import jax
import jax.numpy as jnp
from jax.experimental import pallas as pl
from jax.experimental.pallas import tpu as pltpu


def _round_up(n, m):
    return ((n + m - 1) // m) * m


def _mlp_kernel(x_ref,
                w1_ref, b1_ref,
                w2_ref, b2_ref,
                w3_ref, b3_ref,
                w4_ref, b4_ref,
                w5_ref, b5_ref,
                w6_ref, b6_ref,
                o_ref):
    """One batch tile of the fused MLP. Matmuls hit the MXU with bf16 operands and f32
    accumulation; bias-add/ReLU run on the VPU in f32. Weights are identical for every
    grid step (constant index_map), so they stay resident in VMEM."""
    h = x_ref[...]  # (TB, F_pad) bf16

    def dense(h_bf16, w_ref, b_ref, relu):
        y = jnp.dot(h_bf16, w_ref[...], preferred_element_type=jnp.float32)
        y = y + b_ref[...]
        if relu:
            y = jnp.maximum(y, 0.0)
        return y

    # TODO(synk): nn.Dropout layers are identity in eval mode and are intentionally omitted.
    h = dense(h, w1_ref, b1_ref, True).astype(jnp.bfloat16)   # F   -> 128
    h = dense(h, w2_ref, b2_ref, True).astype(jnp.bfloat16)   # 128 -> 128
    h = dense(h, w3_ref, b3_ref, True).astype(jnp.bfloat16)   # 128 -> 64 (padded 128)
    h = dense(h, w4_ref, b4_ref, True).astype(jnp.bfloat16)   # 64  -> 64 (padded 128)
    h = dense(h, w5_ref, b5_ref, True).astype(jnp.bfloat16)   # 64  -> 32 (padded 128)
    out = dense(h, w6_ref, b6_ref, False)                     # 32  -> 100 (padded 128)
    o_ref[...] = out.astype(o_ref.dtype)


def dnn_forward(x, params, *, batch_tile=256):
    """x: (B, num_features) float32. params: list of (W, b), W: (in, out), b: (1, out).
    Returns (B, num_classes) float32 logits."""
    B, F = x.shape
    num_classes = params[-1][0].shape[1]

    # Pad every feature dim to a multiple of 128 (lane-dense, MXU-friendly).
    dims = [F] + [w.shape[1] for w, _ in params]
    pdims = [_round_up(d, 128) for d in dims]

    # Batch tiling: TB rows per grid step (sublane-aligned), pad B up to a multiple of TB.
    TB = min(batch_tile, _round_up(B, 8))
    B_pad = _round_up(B, TB)

    x_p = jnp.zeros((B_pad, pdims[0]), jnp.bfloat16).at[:B, :F].set(x.astype(jnp.bfloat16))

    flat_params = []
    in_specs = [pl.BlockSpec((TB, pdims[0]), lambda i: (i, 0))]
    for li, (w, b) in enumerate(params):
        fi, fo = w.shape
        w_p = (jnp.zeros((pdims[li], pdims[li + 1]), jnp.bfloat16)
               .at[:fi, :fo].set(w.astype(jnp.bfloat16)))
        b_p = (jnp.zeros((1, pdims[li + 1]), jnp.float32)
               .at[:, :fo].set(b.reshape(1, fo).astype(jnp.float32)))
        flat_params.extend([w_p, b_p])
        # Constant index_map -> weights/biases stay VMEM-resident across batch tiles.
        in_specs.append(pl.BlockSpec(w_p.shape, lambda i: (0, 0)))
        in_specs.append(pl.BlockSpec(b_p.shape, lambda i: (0, 0)))

    out_spec = pl.BlockSpec((TB, pdims[-1]), lambda i: (i, 0))

    flops = 2 * B_pad * sum(pdims[i] * pdims[i + 1] for i in range(len(params)))
    bytes_accessed = (x_p.size * x_p.dtype.itemsize
                      + sum(p.size * p.dtype.itemsize for p in flat_params)
                      + B_pad * pdims[-1] * 4)

    out_p = pl.pallas_call(
        _mlp_kernel,
        out_shape=jax.ShapeDtypeStruct((B_pad, pdims[-1]), jnp.float32),
        grid=(B_pad // TB,),
        in_specs=in_specs,
        out_specs=out_spec,
        compiler_params=pltpu.CompilerParams(dimension_semantics=("parallel",)),
        cost_estimate=pl.CostEstimate(flops=flops, transcendentals=0,
                                      bytes_accessed=bytes_accessed),
    )(x_p, *flat_params)

    return out_p[:B, :num_classes]


def init_params(key, num_features):
    """Deterministic init matching the module's layer shapes
    (Linear: num_features->128->128->64->64->32->100)."""
    dims = [num_features, 128, 128, 64, 64, 32, 100]
    params = []
    for i in range(len(dims) - 1):
        fan_in, fan_out = dims[i], dims[i + 1]
        key, kw, kb = jax.random.split(key, 3)
        bound = 1.0 / jnp.sqrt(jnp.float32(fan_in))  # PyTorch default Linear init range
        w = jax.random.uniform(kw, (fan_in, fan_out), jnp.float32, -bound, bound)
        b = jax.random.uniform(kb, (1, fan_out), jnp.float32, -bound, bound)
        params.append((w, b))
    return params


def reference_forward(x, params):
    """Reference that mirrors the kernel arithmetic (bf16 matmul operands, f32 accumulation)."""
    h = x.astype(jnp.bfloat16)
    for i, (w, b) in enumerate(params):
        y = jnp.dot(h, w.astype(jnp.bfloat16), preferred_element_type=jnp.float32) + b
        if i < len(params) - 1:
            h = jnp.maximum(y, 0.0).astype(jnp.bfloat16)
        else:
            h = y
    return h


if __name__ == "__main__":
    key = jax.random.PRNGKey(0)
    k_x, k_p = jax.random.split(key)

    batch = 8
    num_features = 32  # module is generic in num_features; small synthetic feature count

    x = jax.random.normal(k_x, (batch, num_features), dtype=jnp.float32)
    params = init_params(k_p, num_features)

    out = dnn_forward(x, params)
    out = jax.block_until_ready(out)

    ref = reference_forward(x, params)
    assert out.shape == (batch, 100), out.shape
    assert jnp.allclose(out, ref, atol=1e-3, rtol=1e-3), "mismatch vs reference"

    print("KERNEL_OK")
</pallas_src>

<mosaic_0001>
module attributes {stable_mosaic.version = 11 : i64} {
  func.func @_mlp_kernel(%arg0: i32, %arg1: memref<8x128xbf16, #tpu.memory_space<vmem>>, %arg2: memref<128x128xbf16, #tpu.memory_space<vmem>>, %arg3: memref<1x128xf32, #tpu.memory_space<vmem>>, %arg4: memref<128x128xbf16, #tpu.memory_space<vmem>>, %arg5: memref<1x128xf32, #tpu.memory_space<vmem>>, %arg6: memref<128x128xbf16, #tpu.memory_space<vmem>>, %arg7: memref<1x128xf32, #tpu.memory_space<vmem>>, %arg8: memref<128x128xbf16, #tpu.memory_space<vmem>>, %arg9: memref<1x128xf32, #tpu.memory_space<vmem>>, %arg10: memref<128x128xbf16, #tpu.memory_space<vmem>>, %arg11: memref<1x128xf32, #tpu.memory_space<vmem>>, %arg12: memref<128x128xbf16, #tpu.memory_space<vmem>>, %arg13: memref<1x128xf32, #tpu.memory_space<vmem>>, %arg14: memref<8x128xf32, #tpu.memory_space<vmem>>) attributes {dimension_semantics = [#tpu.dimension_semantics<parallel>], iteration_bounds = array<i64: 1>, scalar_prefetch = 0 : i64, scratch_operands = 0 : i64, tpu.core_type = #tpu.core_type<tc>, window_params = [{transform_indices = @transform_0, window_bounds = array<i64: 8, 128>}, {pipeline_mode = #tpu.pipeline_mode<synchronous>, transform_indices = @transform_1, window_bounds = array<i64: 128, 128>}, {pipeline_mode = #tpu.pipeline_mode<synchronous>, transform_indices = @transform_2, window_bounds = array<i64: 1, 128>}, {pipeline_mode = #tpu.pipeline_mode<synchronous>, transform_indices = @transform_3, window_bounds = array<i64: 128, 128>}, {pipeline_mode = #tpu.pipeline_mode<synchronous>, transform_indices = @transform_4, window_bounds = array<i64: 1, 128>}, {pipeline_mode = #tpu.pipeline_mode<synchronous>, transform_indices = @transform_5, window_bounds = array<i64: 128, 128>}, {pipeline_mode = #tpu.pipeline_mode<synchronous>, transform_indices = @transform_6, window_bounds = array<i64: 1, 128>}, {pipeline_mode = #tpu.pipeline_mode<synchronous>, transform_indices = @transform_7, window_bounds = array<i64: 128, 128>}, {pipeline_mode = #tpu.pipeline_mode<synchronous>, transform_indices = @transform_8, window_bounds = array<i64: 1, 128>}, {pipeline_mode = #tpu.pipeline_mode<synchronous>, transform_indices = @transform_9, window_bounds = array<i64: 128, 128>}, {pipeline_mode = #tpu.pipeline_mode<synchronous>, transform_indices = @transform_10, window_bounds = array<i64: 1, 128>}, {pipeline_mode = #tpu.pipeline_mode<synchronous>, transform_indices = @transform_11, window_bounds = array<i64: 128, 128>}, {pipeline_mode = #tpu.pipeline_mode<synchronous>, transform_indices = @transform_12, window_bounds = array<i64: 1, 128>}, {transform_indices = @transform_13, window_bounds = array<i64: 8, 128>}]} {
    %c0 = arith.constant 0 : index
    %c0_0 = arith.constant 0 : index
    %0 = vector.load %arg1[%c0, %c0_0] : memref<8x128xbf16, #tpu.memory_space<vmem>>, vector<8x128xbf16>
    %c0_1 = arith.constant 0 : index
    %c0_2 = arith.constant 0 : index
    %1 = vector.load %arg2[%c0_1, %c0_2] : memref<128x128xbf16, #tpu.memory_space<vmem>>, vector<128x128xbf16>
    %cst = arith.constant dense<0.000000e+00> : vector<8x128xf32>
    %2 = tpu.matmul %0, %1, %cst {dimension_numbers = #tpu.dot_dimension_numbers<[1], [0], [0], [1], [0, 0, 1, 1], [], []>} : vector<8x128xbf16>, vector<128x128xbf16>, vector<8x128xf32> -> vector<8x128xf32>
    %c0_3 = arith.constant 0 : index
    %c0_4 = arith.constant 0 : index
    %3 = vector.load %arg3[%c0_3, %c0_4] : memref<1x128xf32, #tpu.memory_space<vmem>>, vector<1x128xf32>
    %4 = vector.broadcast %3 : vector<1x128xf32> to vector<8x128xf32>
    %5 = arith.addf %2, %4 : vector<8x128xf32>
    %cst_5 = arith.constant 0.000000e+00 : f32
    %6 = vector.broadcast %cst_5 : f32 to vector<8x128xf32>
    %7 = arith.maximumf %5, %6 : vector<8x128xf32>
    %8 = arith.truncf %7 : vector<8x128xf32> to vector<8x128xbf16>
    %c0_6 = arith.constant 0 : index
    %c0_7 = arith.constant 0 : index
    %9 = vector.load %arg4[%c0_6, %c0_7] : memref<128x128xbf16, #tpu.memory_space<vmem>>, vector<128x128xbf16>
    %cst_8 = arith.constant dense<0.000000e+00> : vector<8x128xf32>
    %10 = tpu.matmul %8, %9, %cst_8 {dimension_numbers = #tpu.dot_dimension_numbers<[1], [0], [0], [1], [0, 0, 1, 1], [], []>} : vector<8x128xbf16>, vector<128x128xbf16>, vector<8x128xf32> -> vector<8x128xf32>
    %c0_9 = arith.constant 0 : index
    %c0_10 = arith.constant 0 : index
    %11 = vector.load %arg5[%c0_9, %c0_10] : memref<1x128xf32, #tpu.memory_space<vmem>>, vector<1x128xf32>
    %12 = vector.broadcast %11 : vector<1x128xf32> to vector<8x128xf32>
    %13 = arith.addf %10, %12 : vector<8x128xf32>
    %cst_11 = arith.constant 0.000000e+00 : f32
    %14 = vector.broadcast %cst_11 : f32 to vector<8x128xf32>
    %15 = arith.maximumf %13, %14 : vector<8x128xf32>
    %16 = arith.truncf %15 : vector<8x128xf32> to vector<8x128xbf16>
    %c0_12 = arith.constant 0 : index
    %c0_13 = arith.constant 0 : index
    %17 = vector.load %arg6[%c0_12, %c0_13] : memref<128x128xbf16, #tpu.memory_space<vmem>>, vector<128x128xbf16>
    %cst_14 = arith.constant dense<0.000000e+00> : vector<8x128xf32>
    %18 = tpu.matmul %16, %17, %cst_14 {dimension_numbers = #tpu.dot_dimension_numbers<[1], [0], [0], [1], [0, 0, 1, 1], [], []>} : vector<8x128xbf16>, vector<128x128xbf16>, vector<8x128xf32> -> vector<8x128xf32>
    %c0_15 = arith.constant 0 : index
    %c0_16 = arith.constant 0 : index
    %19 = vector.load %arg7[%c0_15, %c0_16] : memref<1x128xf32, #tpu.memory_space<vmem>>, vector<1x128xf32>
    %20 = vector.broadcast %19 : vector<1x128xf32> to vector<8x128xf32>
    %21 = arith.addf %18, %20 : vector<8x128xf32>
    %cst_17 = arith.constant 0.000000e+00 : f32
    %22 = vector.broadcast %cst_17 : f32 to vector<8x128xf32>
    %23 = arith.maximumf %21, %22 : vector<8x128xf32>
    %24 = arith.truncf %23 : vector<8x128xf32> to vector<8x128xbf16>
    %c0_18 = arith.constant 0 : index
    %c0_19 = arith.constant 0 : index
    %25 = vector.load %arg8[%c0_18, %c0_19] : memref<128x128xbf16, #tpu.memory_space<vmem>>, vector<128x128xbf16>
    %cst_20 = arith.constant dense<0.000000e+00> : vector<8x128xf32>
    %26 = tpu.matmul %24, %25, %cst_20 {dimension_numbers = #tpu.dot_dimension_numbers<[1], [0], [0], [1], [0, 0, 1, 1], [], []>} : vector<8x128xbf16>, vector<128x128xbf16>, vector<8x128xf32> -> vector<8x128xf32>
    %c0_21 = arith.constant 0 : index
    %c0_22 = arith.constant 0 : index
    %27 = vector.load %arg9[%c0_21, %c0_22] : memref<1x128xf32, #tpu.memory_space<vmem>>, vector<1x128xf32>
    %28 = vector.broadcast %27 : vector<1x128xf32> to vector<8x128xf32>
    %29 = arith.addf %26, %28 : vector<8x128xf32>
    %cst_23 = arith.constant 0.000000e+00 : f32
    %30 = vector.broadcast %cst_23 : f32 to vector<8x128xf32>
    %31 = arith.maximumf %29, %30 : vector<8x128xf32>
    %32 = arith.truncf %31 : vector<8x128xf32> to vector<8x128xbf16>
    %c0_24 = arith.constant 0 : index
    %c0_25 = arith.constant 0 : index
    %33 = vector.load %arg10[%c0_24, %c0_25] : memref<128x128xbf16, #tpu.memory_space<vmem>>, vector<128x128xbf16>
    %cst_26 = arith.constant dense<0.000000e+00> : vector<8x128xf32>
    %34 = tpu.matmul %32, %33, %cst_26 {dimension_numbers = #tpu.dot_dimension_numbers<[1], [0], [0], [1], [0, 0, 1, 1], [], []>} : vector<8x128xbf16>, vector<128x128xbf16>, vector<8x128xf32> -> vector<8x128xf32>
    %c0_27 = arith.constant 0 : index
    %c0_28 = arith.constant 0 : index
    %35 = vector.load %arg11[%c0_27, %c0_28] : memref<1x128xf32, #tpu.memory_space<vmem>>, vector<1x128xf32>
    %36 = vector.broadcast %35 : vector<1x128xf32> to vector<8x128xf32>
    %37 = arith.addf %34, %36 : vector<8x128xf32>
    %cst_29 = arith.constant 0.000000e+00 : f32
    %38 = vector.broadcast %cst_29 : f32 to vector<8x128xf32>
    %39 = arith.maximumf %37, %38 : vector<8x128xf32>
    %40 = arith.truncf %39 : vector<8x128xf32> to vector<8x128xbf16>
    %c0_30 = arith.constant 0 : index
    %c0_31 = arith.constant 0 : index
    %41 = vector.load %arg12[%c0_30, %c0_31] : memref<128x128xbf16, #tpu.memory_space<vmem>>, vector<128x128xbf16>
    %cst_32 = arith.constant dense<0.000000e+00> : vector<8x128xf32>
    %42 = tpu.matmul %40, %41, %cst_32 {dimension_numbers = #tpu.dot_dimension_numbers<[1], [0], [0], [1], [0, 0, 1, 1], [], []>} : vector<8x128xbf16>, vector<128x128xbf16>, vector<8x128xf32> -> vector<8x128xf32>
    %c0_33 = arith.constant 0 : index
    %c0_34 = arith.constant 0 : index
    %43 = vector.load %arg13[%c0_33, %c0_34] : memref<1x128xf32, #tpu.memory_space<vmem>>, vector<1x128xf32>
    %44 = vector.broadcast %43 : vector<1x128xf32> to vector<8x128xf32>
    %45 = arith.addf %42, %44 : vector<8x128xf32>
    %c0_35 = arith.constant 0 : index
    %c0_36 = arith.constant 0 : index
    %46 = vector.load %arg14[%c0_35, %c0_36] : memref<8x128xf32, #tpu.memory_space<vmem>>, vector<8x128xf32>
    tpu.vector_store %arg14[%c0_35, %c0_36], %45 {strides = array<i32>} : memref<8x128xf32, #tpu.memory_space<vmem>>, vector<8x128xf32>,
    return
  }
  func.func @transform_0(%arg0: i32) -> (i32, i32) {
    %c0_i32 = arith.constant 0 : i32
    %c0_i32_0 = arith.constant 0 : i32
    return %arg0, %c0_i32 : i32, i32
  }
  func.func @transform_1(%arg0: i32) -> (i32, i32) {
    %c0_i32 = arith.constant 0 : i32
    %c0_i32_0 = arith.constant 0 : i32
    %c0_i32_1 = arith.constant 0 : i32
    return %c0_i32, %c0_i32_0 : i32, i32
  }
  func.func @transform_2(%arg0: i32) -> (i32, i32) {
    %c0_i32 = arith.constant 0 : i32
    %c0_i32_0 = arith.constant 0 : i32
    %c0_i32_1 = arith.constant 0 : i32
    return %c0_i32, %c0_i32_0 : i32, i32
  }
  func.func @transform_3(%arg0: i32) -> (i32, i32) {
    %c0_i32 = arith.constant 0 : i32
    %c0_i32_0 = arith.constant 0 : i32
    %c0_i32_1 = arith.constant 0 : i32
    return %c0_i32, %c0_i32_0 : i32, i32
  }
  func.func @transform_4(%arg0: i32) -> (i32, i32) {
    %c0_i32 = arith.constant 0 : i32
    %c0_i32_0 = arith.constant 0 : i32
    %c0_i32_1 = arith.constant 0 : i32
    return %c0_i32, %c0_i32_0 : i32, i32
  }
  func.func @transform_5(%arg0: i32) -> (i32, i32) {
    %c0_i32 = arith.constant 0 : i32
    %c0_i32_0 = arith.constant 0 : i32
    %c0_i32_1 = arith.constant 0 : i32
    return %c0_i32, %c0_i32_0 : i32, i32
  }
  func.func @transform_6(%arg0: i32) -> (i32, i32) {
    %c0_i32 = arith.constant 0 : i32
    %c0_i32_0 = arith.constant 0 : i32
    %c0_i32_1 = arith.constant 0 : i32
    return %c0_i32, %c0_i32_0 : i32, i32
  }
  func.func @transform_7(%arg0: i32) -> (i32, i32) {
    %c0_i32 = arith.constant 0 : i32
    %c0_i32_0 = arith.constant 0 : i32
    %c0_i32_1 = arith.constant 0 : i32
    return %c0_i32, %c0_i32_0 : i32, i32
  }
  func.func @transform_8(%arg0: i32) -> (i32, i32) {
    %c0_i32 = arith.constant 0 : i32
    %c0_i32_0 = arith.constant 0 : i32
    %c0_i32_1 = arith.constant 0 : i32
    return %c0_i32, %c0_i32_0 : i32, i32
  }
  func.func @transform_9(%arg0: i32) -> (i32, i32) {
    %c0_i32 = arith.constant 0 : i32
    %c0_i32_0 = arith.constant 0 : i32
    %c0_i32_1 = arith.constant 0 : i32
    return %c0_i32, %c0_i32_0 : i32, i32
  }
  func.func @transform_10(%arg0: i32) -> (i32, i32) {
    %c0_i32 = arith.constant 0 : i32
    %c0_i32_0 = arith.constant 0 : i32
    %c0_i32_1 = arith.constant 0 : i32
    return %c0_i32, %c0_i32_0 : i32, i32
  }
  func.func @transform_11(%arg0: i32) -> (i32, i32) {
    %c0_i32 = arith.constant 0 : i32
    %c0_i32_0 = arith.constant 0 : i32
    %c0_i32_1 = arith.constant 0 : i32
    return %c0_i32, %c0_i32_0 : i32, i32
  }
  func.func @transform_12(%arg0: i32) -> (i32, i32) {
    %c0_i32 = arith.constant 0 : i32
    %c0_i32_0 = arith.constant 0 : i32
    %c0_i32_1 = arith.constant 0 : i32
    return %c0_i32, %c0_i32_0 : i32, i32
  }
  func.func @transform_13(%arg0: i32) -> (i32, i32) {
    %c0_i32 = arith.constant 0 : i32
    %c0_i32_0 = arith.constant 0 : i32
    return %arg0, %c0_i32 : i32, i32
  }
}

</mosaic_0001>

<llo_original>
// kernel: tpu_custom_call.1
$region0: #{tpu_custom_call.1}
  #allocation0 [shape = 'u32[]', space=smem, size = 0x4, offset = 0x4, fixed_abs, tag = 'smem constant byte address 0x4 - core index']
  #allocation1 [shape = 'u32[72,128]{1,0:T(1,128)}', space=vmem, size = 0x9000, scoped, tag = 'internal scratch']
  %s0 = inlined_call_operand.hbm [shape: bf16[8,128], index: 0, kind: input, shape index: {}]
  %s1 = inlined_call_operand.hbm [shape: bf16[128,128], index: 1, kind: input, shape index: {}]
  %s2 = inlined_call_operand.vmem [shape: f32[1,128], index: 2, kind: input, shape index: {}]
  %s3 = inlined_call_operand.hbm [shape: bf16[128,128], index: 3, kind: input, shape index: {}]
  %s4 = inlined_call_operand.vmem [shape: f32[1,128], index: 4, kind: input, shape index: {}]
  %s5 = inlined_call_operand.hbm [shape: bf16[128,128], index: 5, kind: input, shape index: {}]
  %s6 = inlined_call_operand.vmem [shape: f32[1,128], index: 6, kind: input, shape index: {}]
  %s7 = inlined_call_operand.hbm [shape: bf16[128,128], index: 7, kind: input, shape index: {}]
  %s8 = inlined_call_operand.vmem [shape: f32[1,128], index: 8, kind: input, shape index: {}]
  %s9 = inlined_call_operand.hbm [shape: bf16[128,128], index: 9, kind: input, shape index: {}]
  %s10 = inlined_call_operand.vmem [shape: f32[1,128], index: 10, kind: input, shape index: {}]
  %s11 = inlined_call_operand.hbm [shape: bf16[128,128], index: 11, kind: input, shape index: {}]
  %s12 = inlined_call_operand.vmem [shape: f32[1,128], index: 12, kind: input, shape index: {}]
  %s13 = inlined_call_operand.hbm [shape: f32[8,128], index: 13, kind: output, shape index: {}]
  %s14 = sld [smem:[#allocation0]]
  $region90: #{tpu_custom_call.1} parent=0
    _
  %s16 = ssub.s32 1, %s14
  %s17 = scalar_select 0, %s16, %s14
  $region1: #{tpu_custom_call.1} parent=0
    #allocation2 [shape = 'u8[2048]{0}', space=vmem, size = 0x800, scoped, tag = 'input window, operand 0, single buffered']
    #allocation3 [shape = 's32[1]{0}', space=sflag, size = 0x4, scoped, tag = 'scoped memory for tpu_custom_call.1']
    #allocation4 [shape = 's32[1]{0}', space=sflag, size = 0x4, scoped, tag = 'scoped memory for tpu_custom_call.1']
    #allocation5 [shape = 'u8[32768]{0}', space=vmem, size = 0x8000, scoped, tag = 'input window, operand 1, single buffered']
    #allocation6 [shape = 's32[1]{0}', space=sflag, size = 0x4, scoped, tag = 'scoped memory for tpu_custom_call.1']
    #allocation7 [shape = 'u8[32768]{0}', space=vmem, size = 0x8000, scoped, tag = 'input window, operand 3, single buffered']
    #allocation8 [shape = 'u8[32768]{0}', space=vmem, size = 0x8000, scoped, tag = 'input window, operand 5, single buffered']
    #allocation9 [shape = 's32[1]{0}', space=sflag, size = 0x4, scoped, tag = 'scoped memory for tpu_custom_call.1']
    #allocation10 [shape = 'u8[32768]{0}', space=vmem, size = 0x8000, scoped, tag = 'input window, operand 7, single buffered']
    #allocation11 [shape = 'u8[32768]{0}', space=vmem, size = 0x8000, scoped, tag = 'input window, operand 9, single buffered']
    #allocation12 [shape = 's32[1]{0}', space=sflag, size = 0x4, scoped, tag = 'scoped memory for tpu_custom_call.1']
    #allocation13 [shape = 'u8[32768]{0}', space=vmem, size = 0x8000, scoped, tag = 'input window, operand 11, single buffered']
    #allocation14 [shape = 'u8[4096]{0}', space=vmem, size = 0x1000, scoped, tag = 'output window, operand 0, single buffered']
    %18 = vsyncpa [#allocation3], 0
    %19 = vsyncpa [#allocation6], 0
    %20 = vsyncpa [#allocation9], 0
    %21 = vsyncpa [#allocation12], 0
    %22 = vsyncpa [#allocation4], 0
    // Predicated region
    $region2: #{tpu_custom_call.1} parent=1 // pred_check
      _
    $region3: #{tpu_custom_call.1} parent=1 // pred_check_branch
      %24 = sbr.rel (0) target = $region5
    $region4: #{tpu_custom_call.1} parent=1 // pred_region
      %26 = vsyncadd [#allocation3], 0
      %s28 = sshll.u32 %s0, 4
      %s29 = int_to_ptr.hbm [resolvable:$true] %s28
      %s30 = sshll.u32 [#allocation2], 4
      %s31 = int_to_ptr.vmem [resolvable:$true] %s30
      %33 = dma.hbm_to_vmem [thread:$0]  %s29, 64, %s31, [#allocation3]
    $region5: #{tpu_custom_call.1} parent=1 // pred_fallthru
      _
    // Predicated region
    $region6: #{tpu_custom_call.1} parent=1 // pred_check
      _
    $region7: #{tpu_custom_call.1} parent=1 // pred_check_branch
      %35 = sbr.rel (0) target = $region9
    $region8: #{tpu_custom_call.1} parent=1 // pred_region
      %37 = vsyncadd [#allocation6], 0
      %s38 = sshll.u32 %s1, 4
      %s39 = int_to_ptr.hbm [resolvable:$true] %s38
      %s40 = sshll.u32 [#allocation5], 4
      %s41 = int_to_ptr.vmem [resolvable:$true] %s40
      %46 = dma.hbm_to_vmem [thread:$0]  %s39, 1024, %s41, [#allocation6], 64, 64, 4
    $region9: #{tpu_custom_call.1} parent=1 // pred_fallthru
      _
    // Predicated region
    $region10: #{tpu_custom_call.1} parent=1 // pred_check
      _
    $region11: #{tpu_custom_call.1} parent=1 // pred_check_branch
      %48 = sbr.rel (0) target = $region13
    $region12: #{tpu_custom_call.1} parent=1 // pred_region
      _
    $region13: #{tpu_custom_call.1} parent=1 // pred_fallthru
      _
    // Predicated region
    $region14: #{tpu_custom_call.1} parent=1 // pred_check
      _
    $region15: #{tpu_custom_call.1} parent=1 // pred_check_branch
      %50 = sbr.rel (0) target = $region17
    $region16: #{tpu_custom_call.1} parent=1 // pred_region
      %52 = vsyncadd [#allocation6], 0
      %s53 = sshll.u32 %s3, 4
      %s54 = int_to_ptr.hbm [resolvable:$true] %s53
      %s55 = sshll.u32 [#allocation7], 4
      %s56 = int_to_ptr.vmem [resolvable:$true] %s55
      %61 = dma.hbm_to_vmem [thread:$0]  %s54, 1024, %s56, [#allocation6], 64, 64, 4
    $region17: #{tpu_custom_call.1} parent=1 // pred_fallthru
      _
    // Predicated region
    $region18: #{tpu_custom_call.1} parent=1 // pred_check
      _
    $region19: #{tpu_custom_call.1} parent=1 // pred_check_branch
      %63 = sbr.rel (0) target = $region21
    $region20: #{tpu_custom_call.1} parent=1 // pred_region
      _
    $region21: #{tpu_custom_call.1} parent=1 // pred_fallthru
      _
    // Predicated region
    $region22: #{tpu_custom_call.1} parent=1 // pred_check
      _
    $region23: #{tpu_custom_call.1} parent=1 // pred_check_branch
      %65 = sbr.rel (0) target = $region25
    $region24: #{tpu_custom_call.1} parent=1 // pred_region
      %67 = vsyncadd [#allocation9], 0
      %s68 = sshll.u32 %s5, 4
      %s69 = int_to_ptr.hbm [resolvable:$true] %s68
      %s70 = sshll.u32 [#allocation8], 4
      %s71 = int_to_ptr.vmem [resolvable:$true] %s70
      %76 = dma.hbm_to_vmem [thread:$0]  %s69, 1024, %s71, [#allocation9], 64, 64, 4
    $region25: #{tpu_custom_call.1} parent=1 // pred_fallthru
      _
    // Predicated region
    $region26: #{tpu_custom_call.1} parent=1 // pred_check
      _
    $region27: #{tpu_custom_call.1} parent=1 // pred_check_branch
      %78 = sbr.rel (0) target = $region29
    $region28: #{tpu_custom_call.1} parent=1 // pred_region
      _
    $region29: #{tpu_custom_call.1} parent=1 // pred_fallthru
      _
    // Predicated region
    $region30: #{tpu_custom_call.1} parent=1 // pred_check
      _
    $region31: #{tpu_custom_call.1} parent=1 // pred_check_branch
      %80 = sbr.rel (0) target = $region33
    $region32: #{tpu_custom_call.1} parent=1 // pred_region
      %82 = vsyncadd [#allocation9], 0
      %s83 = sshll.u32 %s7, 4
      %s84 = int_to_ptr.hbm [resolvable:$true] %s83
      %s85 = sshll.u32 [#allocation10], 4
      %s86 = int_to_ptr.vmem [resolvable:$true] %s85
      %91 = dma.hbm_to_vmem [thread:$0]  %s84, 1024, %s86, [#allocation9], 64, 64, 4
    $region33: #{tpu_custom_call.1} parent=1 // pred_fallthru
      _
    // Predicated region
    $region34: #{tpu_custom_call.1} parent=1 // pred_check
      _
    $region35: #{tpu_custom_call.1} parent=1 // pred_check_branch
      %93 = sbr.rel (0) target = $region37
    $region36: #{tpu_custom_call.1} parent=1 // pred_region
      _
    $region37: #{tpu_custom_call.1} parent=1 // pred_fallthru
      _
    // Predicated region
    $region38: #{tpu_custom_call.1} parent=1 // pred_check
      _
    $region39: #{tpu_custom_call.1} parent=1 // pred_check_branch
      %95 = sbr.rel (0) target = $region41
    $region40: #{tpu_custom_call.1} parent=1 // pred_region
      %97 = vsyncadd [#allocation12], 0
      %s98 = sshll.u32 %s9, 4
      %s99 = int_to_ptr.hbm [resolvable:$true] %s98
      %s100 = sshll.u32 [#allocation11], 4
      %s101 = int_to_ptr.vmem [resolvable:$true] %s100
      %106 = dma.hbm_to_vmem [thread:$0]  %s99, 1024, %s101, [#allocation12], 64, 64, 4
    $region41: #{tpu_custom_call.1} parent=1 // pred_fallthru
      _
    // Predicated region
    $region42: #{tpu_custom_call.1} parent=1 // pred_check
      _
    $region43: #{tpu_custom_call.1} parent=1 // pred_check_branch
      %108 = sbr.rel (0) target = $region45
    $region44: #{tpu_custom_call.1} parent=1 // pred_region
      _
    $region45: #{tpu_custom_call.1} parent=1 // pred_fallthru
      _
    // Predicated region
    $region46: #{tpu_custom_call.1} parent=1 // pred_check
      _
    $region47: #{tpu_custom_call.1} parent=1 // pred_check_branch
      %110 = sbr.rel (0) target = $region49
    $region48: #{tpu_custom_call.1} parent=1 // pred_region
      %112 = vsyncadd [#allocation12], 0
      %s113 = sshll.u32 %s11, 4
      %s114 = int_to_ptr.hbm [resolvable:$true] %s113
      %s115 = sshll.u32 [#allocation13], 4
      %s116 = int_to_ptr.vmem [resolvable:$true] %s115
      %121 = dma.hbm_to_vmem [thread:$0]  %s114, 1024, %s116, [#allocation12], 64, 64, 4
    $region49: #{tpu_custom_call.1} parent=1 // pred_fallthru
      _
    // Predicated region
    $region50: #{tpu_custom_call.1} parent=1 // pred_check
      _
    $region51: #{tpu_custom_call.1} parent=1 // pred_check_branch
      %123 = sbr.rel (0) target = $region53
    $region52: #{tpu_custom_call.1} parent=1 // pred_region
      _
    $region53: #{tpu_custom_call.1} parent=1 // pred_fallthru
      _
    // Predicated region
    $region54: #{tpu_custom_call.1} parent=1 // pred_check
      _
    $region55: #{tpu_custom_call.1} parent=1 // pred_check_branch
      %125 = sbr.rel (0) target = $region57
    $region56: #{tpu_custom_call.1} parent=1 // pred_region
      %127 = dma.done [#allocation3], 64
    $region57: #{tpu_custom_call.1} parent=1 // pred_fallthru
      _
    // Predicated region
    $region58: #{tpu_custom_call.1} parent=1 // pred_check
      _
    $region59: #{tpu_custom_call.1} parent=1 // pred_check_branch
      %129 = sbr.rel (0) target = $region61
    $region60: #{tpu_custom_call.1} parent=1 // pred_region
      %131 = dma.done [#allocation6], 1024
    $region61: #{tpu_custom_call.1} parent=1 // pred_fallthru
      _
    // Predicated region
    $region62: #{tpu_custom_call.1} parent=1 // pred_check
      _
    $region63: #{tpu_custom_call.1} parent=1 // pred_check_branch
      %133 = sbr.rel (0) target = $region65
    $region64: #{tpu_custom_call.1} parent=1 // pred_region
      %135 = dma.done [#allocation6], 1024
    $region65: #{tpu_custom_call.1} parent=1 // pred_fallthru
      _
    // Predicated region
    $region66: #{tpu_custom_call.1} parent=1 // pred_check
      _
    $region67: #{tpu_custom_call.1} parent=1 // pred_check_branch
      %137 = sbr.rel (0) target = $region69
    $region68: #{tpu_custom_call.1} parent=1 // pred_region
      %139 = dma.done [#allocation9], 1024
    $region69: #{tpu_custom_call.1} parent=1 // pred_fallthru
      _
    // Predicated region
    $region70: #{tpu_custom_call.1} parent=1 // pred_check
      _
    $region71: #{tpu_custom_call.1} parent=1 // pred_check_branch
      %141 = sbr.rel (0) target = $region73
    $region72: #{tpu_custom_call.1} parent=1 // pred_region
      %143 = dma.done [#allocation9], 1024
    $region73: #{tpu_custom_call.1} parent=1 // pred_fallthru
      _
    // Predicated region
    $region74: #{tpu_custom_call.1} parent=1 // pred_check
      _
    $region75: #{tpu_custom_call.1} parent=1 // pred_check_branch
      %145 = sbr.rel (0) target = $region77
    $region76: #{tpu_custom_call.1} parent=1 // pred_region
      %147 = dma.done [#allocation12], 1024
    $region77: #{tpu_custom_call.1} parent=1 // pred_fallthru
      _
    // Predicated region
    $region78: #{tpu_custom_call.1} parent=1 // pred_check
      _
    $region79: #{tpu_custom_call.1} parent=1 // pred_check_branch
      %149 = sbr.rel (0) target = $region81
    $region80: #{tpu_custom_call.1} parent=1 // pred_region
      %151 = dma.done [#allocation12], 1024
    $region81: #{tpu_custom_call.1} parent=1 // pred_fallthru
      _
    %v152 = vld [vmem:[#allocation2] sm:$0xf]
    %v153 = vld [vmem:[#allocation5] sm:$0xf]
    %v154 = vld [vmem:[#allocation5 + $0x4] sm:$0xf]
    %v155 = vld [vmem:[#allocation5 + $0x8] sm:$0xf]
    %v156 = vld [vmem:[#allocation5 + $0xc] sm:$0xf]
    %v157 = vld [vmem:[#allocation5 + $0x10] sm:$0xf]
    %v158 = vld [vmem:[#allocation5 + $0x14] sm:$0xf]
    %v159 = vld [vmem:[#allocation5 + $0x18] sm:$0xf]
    %v160 = vld [vmem:[#allocation5 + $0x1c] sm:$0xf]
    %v161 = vld [vmem:[#allocation5 + $0x20] sm:$0xf]
    %v162 = vld [vmem:[#allocation5 + $0x24] sm:$0xf]
    %v163 = vld [vmem:[#allocation5 + $0x28] sm:$0xf]
    %v164 = vld [vmem:[#allocation5 + $0x2c] sm:$0xf]
    %v165 = vld [vmem:[#allocation5 + $0x30] sm:$0xf]
    %v166 = vld [vmem:[#allocation5 + $0x34] sm:$0xf]
    %v167 = vld [vmem:[#allocation5 + $0x38] sm:$0xf]
    %v168 = vld [vmem:[#allocation5 + $0x3c] sm:$0xf]
    %v169 = vld [vmem:[%s2] sm:$0x1]
    %v171 = vperm.slane %v169, 0
    %v189 = vunpack.c.l.b16 %v153
    %v190 = vunpack.c.l.b16 %v154
    %v191 = vunpack.c.l.b16 %v155
    %v192 = vunpack.c.l.b16 %v156
    %v193 = vunpack.c.l.b16 %v157
    %v194 = vunpack.c.l.b16 %v158
    %v195 = vunpack.c.l.b16 %v159
    %v196 = vunpack.c.l.b16 %v160
    %v197 = vunpack.c.l.b16 %v161
    %v198 = vunpack.c.l.b16 %v162
    %v199 = vunpack.c.l.b16 %v163
    %v200 = vunpack.c.l.b16 %v164
    %v201 = vunpack.c.l.b16 %v165
    %v202 = vunpack.c.l.b16 %v166
    %v203 = vunpack.c.l.b16 %v167
    %v204 = vunpack.c.l.b16 %v168
    %v205 = vpack.c.b16 %v190, %v189
    %v206 = vpack.c.b16 %v192, %v191
    %v207 = vpack.c.b16 %v194, %v193
    %v208 = vpack.c.b16 %v196, %v195
    %v209 = vpack.c.b16 %v198, %v197
    %v210 = vpack.c.b16 %v200, %v199
    %v211 = vpack.c.b16 %v202, %v201
    %v212 = vpack.c.b16 %v204, %v203
    %221 = vmatpush.bf16.msra.mxu0 %v212
    %222 = vmatpush.bf16.msra.mxu0 %v211
    %223 = vmatpush.bf16.msra.mxu0 %v210
    %224 = vmatpush.bf16.msra.mxu0 %v209
    %225 = vmatpush.bf16.msra.mxu0 %v208
    %226 = vmatpush.bf16.msra.mxu0 %v207
    %227 = vmatpush.bf16.msra.mxu0 %v206
    %228 = vmatpush.bf16.msra.mxu0 %v205
    %229 = vmatmul.bf16.gmra.mxu0 %v152
    %v230 = vpop.f32.mrf.mxu0
    %v231 = vadd.f32 %v171, %v230
    %v232 = vpop.f32.mrf.mxu0
    %233 = vdwg.mxu0
    %v234 = vmax.f32 %v231, 0.0
    %v235 = vpack.c.bf16 %v234, %v234
    %v236 = vld [vmem:[#allocation7] sm:$0xf]
    %v237 = vld [vmem:[#allocation7 + $0x4] sm:$0xf]
    %v238 = vld [vmem:[#allocation7 + $0x8] sm:$0xf]
    %v239 = vld [vmem:[#allocation7 + $0xc] sm:$0xf]
    %v240 = vld [vmem:[#allocation7 + $0x10] sm:$0xf]
    %v241 = vld [vmem:[#allocation7 + $0x14] sm:$0xf]
    %v242 = vld [vmem:[#allocation7 + $0x18] sm:$0xf]
    %v243 = vld [vmem:[#allocation7 + $0x1c] sm:$0xf]
    %v244 = vld [vmem:[#allocation7 + $0x20] sm:$0xf]
    %v245 = vld [vmem:[#allocation7 + $0x24] sm:$0xf]
    %v246 = vld [vmem:[#allocation7 + $0x28] sm:$0xf]
    %v247 = vld [vmem:[#allocation7 + $0x2c] sm:$0xf]
    %v248 = vld [vmem:[#allocation7 + $0x30] sm:$0xf]
    %v249 = vld [vmem:[#allocation7 + $0x34] sm:$0xf]
    %v250 = vld [vmem:[#allocation7 + $0x38] sm:$0xf]
    %v251 = vld [vmem:[#allocation7 + $0x3c] sm:$0xf]
    %v252 = vld [vmem:[%s4] sm:$0x1]
    %v254 = vperm.slane %v252, 0
    %v272 = vunpack.c.l.b16 %v236
    %v273 = vunpack.c.l.b16 %v237
    %v274 = vunpack.c.l.b16 %v238
    %v275 = vunpack.c.l.b16 %v239
    %v276 = vunpack.c.l.b16 %v240
    %v277 = vunpack.c.l.b16 %v241
    %v278 = vunpack.c.l.b16 %v242
    %v279 = vunpack.c.l.b16 %v243
    %v280 = vunpack.c.l.b16 %v244
    %v281 = vunpack.c.l.b16 %v245
    %v282 = vunpack.c.l.b16 %v246
    %v283 = vunpack.c.l.b16 %v247
    %v284 = vunpack.c.l.b16 %v248
    %v285 = vunpack.c.l.b16 %v249
    %v286 = vunpack.c.l.b16 %v250
    %v287 = vunpack.c.l.b16 %v251
    %v288 = vpack.c.b16 %v273, %v272
    %v289 = vpack.c.b16 %v275, %v274
    %v290 = vpack.c.b16 %v277, %v276
    %v291 = vpack.c.b16 %v279, %v278
    %v292 = vpack.c.b16 %v281, %v280
    %v293 = vpack.c.b16 %v283, %v282
    %v294 = vpack.c.b16 %v285, %v284
    %v295 = vpack.c.b16 %v287, %v286
    %304 = vmatpush.bf16.msra.mxu0 %v295
    %305 = vmatpush.bf16.msra.mxu0 %v294
    %306 = vmatpush.bf16.msra.mxu0 %v293
    %307 = vmatpush.bf16.msra.mxu0 %v292
    %308 = vmatpush.bf16.msra.mxu0 %v291
    %309 = vmatpush.bf16.msra.mxu0 %v290
    %310 = vmatpush.bf16.msra.mxu0 %v289
    %311 = vmatpush.bf16.msra.mxu0 %v288
    %312 = vmatmul.bf16.gmra.mxu0 %v235
    %v313 = vpop.f32.mrf.mxu0
    %v314 = vadd.f32 %v254, %v313
    %v315 = vpop.f32.mrf.mxu0
    %316 = vdwg.mxu0
    %v317 = vmax.f32 %v314, 0.0
    %v318 = vpack.c.bf16 %v317, %v317
    %v319 = vld [vmem:[#allocation8] sm:$0xf]
    %v320 = vld [vmem:[#allocation8 + $0x4] sm:$0xf]
    %v321 = vld [vmem:[#allocation8 + $0x8] sm:$0xf]
    %v322 = vld [vmem:[#allocation8 + $0xc] sm:$0xf]
    %v323 = vld [vmem:[#allocation8 + $0x10] sm:$0xf]
    %v324 = vld [vmem:[#allocation8 + $0x14] sm:$0xf]
    %v325 = vld [vmem:[#allocation8 + $0x18] sm:$0xf]
    %v326 = vld [vmem:[#allocation8 + $0x1c] sm:$0xf]
    %v327 = vld [vmem:[#allocation8 + $0x20] sm:$0xf]
    %v328 = vld [vmem:[#allocation8 + $0x24] sm:$0xf]
    %v329 = vld [vmem:[#allocation8 + $0x28] sm:$0xf]
    %v330 = vld [vmem:[#allocation8 + $0x2c] sm:$0xf]
    %v331 = vld [vmem:[#allocation8 + $0x30] sm:$0xf]
    %v332 = vld [vmem:[#allocation8 + $0x34] sm:$0xf]
    %v333 = vld [vmem:[#allocation8 + $0x38] sm:$0xf]
    %v334 = vld [vmem:[#allocation8 + $0x3c] sm:$0xf]
    %v335 = vld [vmem:[%s6] sm:$0x1]
    %v337 = vperm.slane %v335, 0
    %v355 = vunpack.c.l.b16 %v319
    %v356 = vunpack.c.l.b16 %v320
    %v357 = vunpack.c.l.b16 %v321
    %v358 = vunpack.c.l.b16 %v322
    %v359 = vunpack.c.l.b16 %v323
    %v360 = vunpack.c.l.b16 %v324
    %v361 = vunpack.c.l.b16 %v325
    %v362 = vunpack.c.l.b16 %v326
    %v363 = vunpack.c.l.b16 %v327
    %v364 = vunpack.c.l.b16 %v328
    %v365 = vunpack.c.l.b16 %v329
    %v366 = vunpack.c.l.b16 %v330
    %v367 = vunpack.c.l.b16 %v331
    %v368 = vunpack.c.l.b16 %v332
    %v369 = vunpack.c.l.b16 %v333
    %v370 = vunpack.c.l.b16 %v334
    %v371 = vpack.c.b16 %v356, %v355
    %v372 = vpack.c.b16 %v358, %v357
    %v373 = vpack.c.b16 %v360, %v359
    %v374 = vpack.c.b16 %v362, %v361
    %v375 = vpack.c.b16 %v364, %v363
    %v376 = vpack.c.b16 %v366, %v365
    %v377 = vpack.c.b16 %v368, %v367
    %v378 = vpack.c.b16 %v370, %v369
    %387 = vmatpush.bf16.msra.mxu0 %v378
    %388 = vmatpush.bf16.msra.mxu0 %v377
    %389 = vmatpush.bf16.msra.mxu0 %v376
    %390 = vmatpush.bf16.msra.mxu0 %v375
    %391 = vmatpush.bf16.msra.mxu0 %v374
    %392 = vmatpush.bf16.msra.mxu0 %v373
    %393 = vmatpush.bf16.msra.mxu0 %v372
    %394 = vmatpush.bf16.msra.mxu0 %v371
    %395 = vmatmul.bf16.gmra.mxu0 %v318
    %v396 = vpop.f32.mrf.mxu0
    %v397 = vadd.f32 %v337, %v396
    %v398 = vpop.f32.mrf.mxu0
    %399 = vdwg.mxu0
    %v400 = vmax.f32 %v397, 0.0
    %v401 = vpack.c.bf16 %v400, %v400
    %v402 = vld [vmem:[#allocation10] sm:$0xf]
    %v403 = vld [vmem:[#allocation10 + $0x4] sm:$0xf]
    %v404 = vld [vmem:[#allocation10 + $0x8] sm:$0xf]
    %v405 = vld [vmem:[#allocation10 + $0xc] sm:$0xf]
    %v406 = vld [vmem:[#allocation10 + $0x10] sm:$0xf]
    %v407 = vld [vmem:[#allocation10 + $0x14] sm:$0xf]
    %v408 = vld [vmem:[#allocation10 + $0x18] sm:$0xf]
    %v409 = vld [vmem:[#allocation10 + $0x1c] sm:$0xf]
    %v410 = vld [vmem:[#allocation10 + $0x20] sm:$0xf]
    %v411 = vld [vmem:[#allocation10 + $0x24] sm:$0xf]
    %v412 = vld [vmem:[#allocation10 + $0x28] sm:$0xf]
    %v413 = vld [vmem:[#allocation10 + $0x2c] sm:$0xf]
    %v414 = vld [vmem:[#allocation10 + $0x30] sm:$0xf]
    %v415 = vld [vmem:[#allocation10 + $0x34] sm:$0xf]
    %v416 = vld [vmem:[#allocation10 + $0x38] sm:$0xf]
    %v417 = vld [vmem:[#allocation10 + $0x3c] sm:$0xf]
    %v418 = vld [vmem:[%s8] sm:$0x1]
    %v420 = vperm.slane %v418, 0
    %v438 = vunpack.c.l.b16 %v402
    %v439 = vunpack.c.l.b16 %v403
    %v440 = vunpack.c.l.b16 %v404
    %v441 = vunpack.c.l.b16 %v405
    %v442 = vunpack.c.l.b16 %v406
    %v443 = vunpack.c.l.b16 %v407
    %v444 = vunpack.c.l.b16 %v408
    %v445 = vunpack.c.l.b16 %v409
    %v446 = vunpack.c.l.b16 %v410
    %v447 = vunpack.c.l.b16 %v411
    %v448 = vunpack.c.l.b16 %v412
    %v449 = vunpack.c.l.b16 %v413
    %v450 = vunpack.c.l.b16 %v414
    %v451 = vunpack.c.l.b16 %v415
    %v452 = vunpack.c.l.b16 %v416
    %v453 = vunpack.c.l.b16 %v417
    %v454 = vpack.c.b16 %v439, %v438
    %v455 = vpack.c.b16 %v441, %v440
    %v456 = vpack.c.b16 %v443, %v442
    %v457 = vpack.c.b16 %v445, %v444
    %v458 = vpack.c.b16 %v447, %v446
    %v459 = vpack.c.b16 %v449, %v448
    %v460 = vpack.c.b16 %v451, %v450
    %v461 = vpack.c.b16 %v453, %v452
    %470 = vmatpush.bf16.msra.mxu0 %v461
    %471 = vmatpush.bf16.msra.mxu0 %v460
    %472 = vmatpush.bf16.msra.mxu0 %v459
    %473 = vmatpush.bf16.msra.mxu0 %v458
    %474 = vmatpush.bf16.msra.mxu0 %v457
    %475 = vmatpush.bf16.msra.mxu0 %v456
    %476 = vmatpush.bf16.msra.mxu0 %v455
    %477 = vmatpush.bf16.msra.mxu0 %v454
    %478 = vmatmul.bf16.gmra.mxu0 %v401
    %v479 = vpop.f32.mrf.mxu0
    %v480 = vadd.f32 %v420, %v479
    %v481 = vpop.f32.mrf.mxu0
    %482 = vdwg.mxu0
    %v483 = vmax.f32 %v480, 0.0
    %v484 = vpack.c.bf16 %v483, %v483
    %v485 = vld [vmem:[#allocation11] sm:$0xf]
    %v486 = vld [vmem:[#allocation11 + $0x4] sm:$0xf]
    %v487 = vld [vmem:[#allocation11 + $0x8] sm:$0xf]
    %v488 = vld [vmem:[#allocation11 + $0xc] sm:$0xf]
    %v489 = vld [vmem:[#allocation11 + $0x10] sm:$0xf]
    %v490 = vld [vmem:[#allocation11 + $0x14] sm:$0xf]
    %v491 = vld [vmem:[#allocation11 + $0x18] sm:$0xf]
    %v492 = vld [vmem:[#allocation11 + $0x1c] sm:$0xf]
    %v493 = vld [vmem:[#allocation11 + $0x20] sm:$0xf]
    %v494 = vld [vmem:[#allocation11 + $0x24] sm:$0xf]
    %v495 = vld [vmem:[#allocation11 + $0x28] sm:$0xf]
    %v496 = vld [vmem:[#allocation11 + $0x2c] sm:$0xf]
    %v497 = vld [vmem:[#allocation11 + $0x30] sm:$0xf]
    %v498 = vld [vmem:[#allocation11 + $0x34] sm:$0xf]
    %v499 = vld [vmem:[#allocation11 + $0x38] sm:$0xf]
    %v500 = vld [vmem:[#allocation11 + $0x3c] sm:$0xf]
    %v501 = vld [vmem:[%s10] sm:$0x1]
    %v503 = vperm.slane %v501, 0
    %v521 = vunpack.c.l.b16 %v485
    %v522 = vunpack.c.l.b16 %v486
    %v523 = vunpack.c.l.b16 %v487
    %v524 = vunpack.c.l.b16 %v488
    %v525 = vunpack.c.l.b16 %v489
    %v526 = vunpack.c.l.b16 %v490
    %v527 = vunpack.c.l.b16 %v491
    %v528 = vunpack.c.l.b16 %v492
    %v529 = vunpack.c.l.b16 %v493
    %v530 = vunpack.c.l.b16 %v494
    %v531 = vunpack.c.l.b16 %v495
    %v532 = vunpack.c.l.b16 %v496
    %v533 = vunpack.c.l.b16 %v497
    %v534 = vunpack.c.l.b16 %v498
    %v535 = vunpack.c.l.b16 %v499
    %v536 = vunpack.c.l.b16 %v500
    %v537 = vpack.c.b16 %v522, %v521
    %v538 = vpack.c.b16 %v524, %v523
    %v539 = vpack.c.b16 %v526, %v525
    %v540 = vpack.c.b16 %v528, %v527
    %v541 = vpack.c.b16 %v530, %v529
    %v542 = vpack.c.b16 %v532, %v531
    %v543 = vpack.c.b16 %v534, %v533
    %v544 = vpack.c.b16 %v536, %v535
    %553 = vmatpush.bf16.msra.mxu0 %v544
    %554 = vmatpush.bf16.msra.mxu0 %v543
    %555 = vmatpush.bf16.msra.mxu0 %v542
    %556 = vmatpush.bf16.msra.mxu0 %v541
    %557 = vmatpush.bf16.msra.mxu0 %v540
    %558 = vmatpush.bf16.msra.mxu0 %v539
    %559 = vmatpush.bf16.msra.mxu0 %v538
    %560 = vmatpush.bf16.msra.mxu0 %v537
    %561 = vmatmul.bf16.gmra.mxu0 %v484
    %v562 = vpop.f32.mrf.mxu0
    %v563 = vadd.f32 %v503, %v562
    %v564 = vpop.f32.mrf.mxu0
    %565 = vdwg.mxu0
    %v566 = vmax.f32 %v563, 0.0
    %v567 = vpack.c.bf16 %v566, %v566
    %v568 = vld [vmem:[#allocation13] sm:$0xf]
    %v569 = vld [vmem:[#allocation13 + $0x4] sm:$0xf]
    %v570 = vld [vmem:[#allocation13 + $0x8] sm:$0xf]
    %v571 = vld [vmem:[#allocation13 + $0xc] sm:$0xf]
    %v572 = vld [vmem:[#allocation13 + $0x10] sm:$0xf]
    %v573 = vld [vmem:[#allocation13 + $0x14] sm:$0xf]
    %v574 = vld [vmem:[#allocation13 + $0x18] sm:$0xf]
    %v575 = vld [vmem:[#allocation13 + $0x1c] sm:$0xf]
    %v576 = vld [vmem:[#allocation13 + $0x20] sm:$0xf]
    %v577 = vld [vmem:[#allocation13 + $0x24] sm:$0xf]
    %v578 = vld [vmem:[#allocation13 + $0x28] sm:$0xf]
    %v579 = vld [vmem:[#allocation13 + $0x2c] sm:$0xf]
    %v580 = vld [vmem:[#allocation13 + $0x30] sm:$0xf]
    %v581 = vld [vmem:[#allocation13 + $0x34] sm:$0xf]
    %v582 = vld [vmem:[#allocation13 + $0x38] sm:$0xf]
    %v583 = vld [vmem:[#allocation13 + $0x3c] sm:$0xf]
    %v584 = vld [vmem:[%s12] sm:$0x1]
    %v586 = vperm.slane %v584, 0
    %v604 = vunpack.c.l.b16 %v568
    %v605 = vunpack.c.l.b16 %v569
    %v606 = vunpack.c.l.b16 %v570
    %v607 = vunpack.c.l.b16 %v571
    %v608 = vunpack.c.l.b16 %v572
    %v609 = vunpack.c.l.b16 %v573
    %v610 = vunpack.c.l.b16 %v574
    %v611 = vunpack.c.l.b16 %v575
    %v612 = vunpack.c.l.b16 %v576
    %v613 = vunpack.c.l.b16 %v577
    %v614 = vunpack.c.l.b16 %v578
    %v615 = vunpack.c.l.b16 %v579
    %v616 = vunpack.c.l.b16 %v580
    %v617 = vunpack.c.l.b16 %v581
    %v618 = vunpack.c.l.b16 %v582
    %v619 = vunpack.c.l.b16 %v583
    %v620 = vpack.c.b16 %v605, %v604
    %v621 = vpack.c.b16 %v607, %v606
    %v622 = vpack.c.b16 %v609, %v608
    %v623 = vpack.c.b16 %v611, %v610
    %v624 = vpack.c.b16 %v613, %v612
    %v625 = vpack.c.b16 %v615, %v614
    %v626 = vpack.c.b16 %v617, %v616
    %v627 = vpack.c.b16 %v619, %v618
    %636 = vmatpush.bf16.msra.mxu0 %v627
    %637 = vmatpush.bf16.msra.mxu0 %v626
    %638 = vmatpush.bf16.msra.mxu0 %v625
    %639 = vmatpush.bf16.msra.mxu0 %v624
    %640 = vmatpush.bf16.msra.mxu0 %v623
    %641 = vmatpush.bf16.msra.mxu0 %v622
    %642 = vmatpush.bf16.msra.mxu0 %v621
    %643 = vmatpush.bf16.msra.mxu0 %v620
    %644 = vmatmul.bf16.gmra.mxu0 %v567
    %v645 = vpop.f32.mrf.mxu0
    %v646 = vadd.f32 %v586, %v645
    %v647 = vpop.f32.mrf.mxu0
    %648 = vdwg.mxu0
    %649 = vst [vmem:[#allocation14] sm:$0xff] %v646
    // Predicated region
    $region82: #{tpu_custom_call.1} parent=1 // pred_check
      _
    $region83: #{tpu_custom_call.1} parent=1 // pred_check_branch
      %651 = sbr.rel (0) target = $region85
    $region84: #{tpu_custom_call.1} parent=1 // pred_region
      %653 = vsyncadd [#allocation4], 0
      %s655 = sshll.u32 [#allocation14], 4
      %s656 = int_to_ptr.vmem [resolvable:$true] %s655
      %s657 = sshll.u32 %s13, 4
      %s658 = int_to_ptr.hbm [resolvable:$true] %s657
      %660 = dma.vmem_to_hbm [thread:$0]  %s656, 128, %s658, [#allocation4]
    $region85: #{tpu_custom_call.1} parent=1 // pred_fallthru
      _
    // Predicated region
    $region86: #{tpu_custom_call.1} parent=1 // pred_check
      _
    $region87: #{tpu_custom_call.1} parent=1 // pred_check_branch
      %662 = sbr.rel (0) target = $region89
    $region88: #{tpu_custom_call.1} parent=1 // pred_region
      %664 = dma.done [#allocation4], 128
    $region89: #{tpu_custom_call.1} parent=1 // pred_fallthru
      _
    %665 = vsyncpa [#allocation3], 1
    %666 = vsyncpa [#allocation6], 1
    %667 = vsyncpa [#allocation9], 1
    %668 = vsyncpa [#allocation12], 1
    %669 = vsyncpa [#allocation4], 1

</llo_original>
